<compile_context>
chip_gen: v6e
topology: v6e:2x2x1
jax: 0.10.0
libtpu: 0.0.40
codegen_flags: <defaults>
</compile_context>

<pallas_src>
import functools
import math

import jax
import jax.numpy as jnp
from jax.experimental import pallas as pl
from jax.experimental.pallas import tpu as pltpu

M_MARGIN = 0.2
S_SCALE = 10.0
_MS = M_MARGIN * S_SCALE
_ADJ = math.exp(-_MS) - 1.0          # exp(-m*s) - 1, folded margin correction


def _round_up(a, b):
    return -(-a // b) * b


def _margin_loss_kernel(x_ref, tgt_ref, psum_ref, *, n_total):
    i = pl.program_id(0)
    x = x_ref[...]                                   # (TILE_N, C), input dtype
    tgt = tgt_ref[...]                               # (TILE_N, 1) int32
    tn, c = x.shape

    # one-hot "index" via class-id iota compare (== torch scatter_ of ones).
    # NOTE: an out-of-range target (e.g. ignore_index=-100) gives an all-false
    # row and a garbage (finite) contribution instead of erroring like PyTorch;
    # the module contract assumes 0 <= target < C.
    col = jax.lax.broadcasted_iota(jnp.int32, (tn, c), 1)
    index = col == tgt                               # (TILE_N, C) bool

    # Stable logsumexp of out = where(index, x - m*s, x) WITHOUT building out:
    # out <= x elementwise, so max(x) is a valid stabilizer, and
    #   sum(exp(out - max)) = sum_e + (exp(-m*s) - 1) * exp(d_t)
    # with e = exp(x - max) and d_t = x[target] - max.
    row_max = jnp.max(x, axis=-1, keepdims=True)     # stays in input dtype
    d = (x - row_max).astype(jnp.float32)            # f32 for exp/log accuracy
    e = jnp.exp(d)                                   # EUP
    sum_e = jnp.sum(e, axis=-1, keepdims=True)       # (TILE_N, 1)
    tgt_d = jnp.sum(jnp.where(index, d, 0.0), axis=-1, keepdims=True)

    s_out = sum_e + _ADJ * jnp.exp(tgt_d)
    # ce = logsumexp(out) - out[target]
    #    = (log(s_out) + max) - (d_t + max - m*s) = log(s_out) - d_t + m*s
    ce = jnp.log(s_out) - tgt_d + _MS                # (TILE_N, 1) f32

    # Drop padded rows of the last tile with a select (a multiply would leak
    # NaN/inf from the out-of-bounds block fetch).
    row_ids = i * tn + jax.lax.broadcasted_iota(jnp.int32, (tn, 1), 0)
    ce = jnp.where(row_ids < n_total, ce, 0.0)

    # Lane-dense, unmasked (8, 128) store: partial sum at [0, 0], zeros
    # elsewhere, so the wrapper's global jnp.sum is exact (no strided gather).
    psum = jnp.sum(ce, axis=0, keepdims=True)        # (1, 1)
    sub = jax.lax.broadcasted_iota(jnp.int32, psum_ref.shape, 0)
    lane = jax.lax.broadcasted_iota(jnp.int32, psum_ref.shape, 1)
    psum_ref[...] = jnp.where((sub == 0) & (lane == 0),
                              jnp.broadcast_to(psum, psum_ref.shape), 0.0)


def margin_loss(x, target, *, tile_n=None):
    """x: (N, C) float (f32 or bf16), target: (N,) int -> scalar f32 loss."""
    n, c = x.shape
    itemsize = jnp.dtype(x.dtype).itemsize
    sublane = 16 if itemsize == 2 else 8             # bf16 min tile is (16,128)

    # Generation-aware VMEM budget: v5e/v6e (128 MiB VMEM) -> ~8 MiB f32-equiv
    # tile + 64 MiB scoped limit; v7x (64 MiB/TC) or unknown -> ~4 MiB + 48 MiB.
    try:
        vmem_cap = int(getattr(pltpu.get_tpu_info(), "vmem_capacity_bytes", 0))
    except Exception:
        vmem_cap = 0
    if vmem_cap > 64 * 1024 * 1024:
        tile_budget, vmem_limit = 8 * 1024 * 1024, 64 * 1024 * 1024
    else:
        tile_budget, vmem_limit = 4 * 1024 * 1024, 48 * 1024 * 1024

    if tile_n is None:
        rows = max(sublane, (tile_budget // (4 * c)) // sublane * sublane)
        rows = min(rows, _round_up(n, sublane))              # never exceed batch
        rows = min(rows, _round_up(pl.cdiv(n, 2), sublane))  # >=2 tiles (v7x TCs)
        tile_n = rows
    if tile_n % sublane:
        raise ValueError(
            f"tile_n={tile_n} must be a multiple of {sublane} for dtype {x.dtype}")
    num_tiles = pl.cdiv(n, tile_n)

    tgt = target.astype(jnp.int32).reshape(n, 1)

    cost = pl.CostEstimate(
        flops=6 * n * c,
        transcendentals=n * c + 2 * n,
        bytes_accessed=n * c * itemsize + 4 * n + num_tiles * 8 * 128 * 4,
    )

    partials = pl.pallas_call(
        functools.partial(_margin_loss_kernel, n_total=n),
        out_shape=jax.ShapeDtypeStruct((num_tiles * 8, 128), jnp.float32),
        grid_spec=pltpu.PrefetchScalarGridSpec(
            num_scalar_prefetch=0,
            grid=(num_tiles,),
            in_specs=[
                pl.BlockSpec((tile_n, c), lambda i: (i, 0)),
                pl.BlockSpec((tile_n, 1), lambda i: (i, 0)),
            ],
            out_specs=pl.BlockSpec((8, 128), lambda i: (i, 0)),
        ),
        compiler_params=pltpu.CompilerParams(
            dimension_semantics=("parallel",),
            vmem_limit_bytes=vmem_limit,
        ),
        cost_estimate=cost,
    )(x, tgt)

    # TODO(synk): per-class `weight` (weighted mean) not implemented; the module
    # default is weight=None, which this matches.
    # TODO(synk): vocab-scale C would need a second grid axis over classes with
    # an online logsumexp; here C is assumed to fit one VMEM tile.
    # TODO(synk): for C < 128 the lane dim is padded to 128; packing 128//C rows
    # per lane-row would improve lane/XLU/VMEM utilization for narrow-class C.
    return jnp.sum(partials) * (1.0 / n)


if __name__ == "__main__":
    key = jax.random.PRNGKey(0)

    def reference(x, target):
        xf = x.astype(jnp.float32)
        _, c = xf.shape
        one_hot = jax.nn.one_hot(target, c, dtype=jnp.bool_)
        out = jnp.where(one_hot, xf - M_MARGIN * S_SCALE, xf)
        return jnp.mean(
            jax.nn.logsumexp(out, axis=-1)
            - jnp.take_along_axis(out, target[:, None], axis=1)[:, 0]
        )

    cases = [
        # (n, c, tile_n, dtype, atol, rtol)
        (16, 16, 8, jnp.float32, 1e-5, 1e-5),      # explicit small tiles, 2 tiles
        (11, 16, 8, jnp.float32, 1e-5, 1e-5),      # padded last tile
        (64, 16, None, jnp.float32, 1e-5, 1e-5),   # default tile heuristic path
        (32, 16, None, jnp.bfloat16, 5e-2, 5e-2),  # bf16 path (tile_n % 16 == 0)
    ]
    ok = True
    for (n, c, tn, dt, atol, rtol) in cases:
        kx, kt, key = jax.random.split(key, 3)
        x = (jax.random.normal(kx, (n, c), dtype=jnp.float32) * 3.0).astype(dt)
        target = jax.random.randint(kt, (n,), 0, c, dtype=jnp.int32)

        loss = margin_loss(x, target, tile_n=tn)
        jax.block_until_ready(loss)
        ref = reference(x, target)
        ok &= bool(jnp.allclose(loss, ref, atol=atol, rtol=rtol))

    assert ok
    print("KERNEL_OK")
</pallas_src>

<mosaic_0001>
module attributes {stable_mosaic.version = 11 : i64} {
  func.func @_margin_loss_kernel(%arg0: i32, %arg1: memref<8x16xf32, #tpu.memory_space<vmem>>, %arg2: memref<8x1xi32, #tpu.memory_space<vmem>>, %arg3: memref<8x128xf32, #tpu.memory_space<vmem>>) attributes {dimension_semantics = [#tpu.dimension_semantics<parallel>], iteration_bounds = array<i64: 2>, scalar_prefetch = 0 : i64, scratch_operands = 0 : i64, tpu.core_type = #tpu.core_type<tc>, window_params = [{transform_indices = @transform_0, window_bounds = array<i64: 8, 16>}, {transform_indices = @transform_1, window_bounds = array<i64: 8, 1>}, {transform_indices = @transform_2, window_bounds = array<i64: 8, 128>}]} {
    %c0 = arith.constant 0 : index
    %c0_0 = arith.constant 0 : index
    %0 = vector.load %arg1[%c0, %c0_0] : memref<8x16xf32, #tpu.memory_space<vmem>>, vector<8x16xf32>
    %c0_1 = arith.constant 0 : index
    %c0_2 = arith.constant 0 : index
    %1 = vector.load %arg2[%c0_1, %c0_2] : memref<8x1xi32, #tpu.memory_space<vmem>>, vector<8x1xi32>
    %2 = tpu.iota {dimensions = array<i32: 1>} : vector<8x16xi32>
    %3 = vector.broadcast %1 : vector<8x1xi32> to vector<8x16xi32>
    %4 = arith.cmpi eq, %2, %3 : vector<8x16xi32>
    %cst = arith.constant dense<0xFF800000> : vector<8xf32>
    %5 = vector.multi_reduction <maximumf>, %0, %cst [1] : vector<8x16xf32> to vector<8xf32>
    %6 = vector.shape_cast %5 : vector<8xf32> to vector<8x1xf32>
    %7 = vector.broadcast %6 : vector<8x1xf32> to vector<8x16xf32>
    %8 = arith.subf %0, %7 : vector<8x16xf32>
    %9 = math.exp %8 : vector<8x16xf32>
    %cst_3 = arith.constant dense<0.000000e+00> : vector<8xf32>
    %10 = vector.multi_reduction <add>, %9, %cst_3 [1] : vector<8x16xf32> to vector<8xf32>
    %11 = vector.shape_cast %10 : vector<8xf32> to vector<8x1xf32>
    %cst_4 = arith.constant 0.000000e+00 : f32
    %12 = vector.broadcast %cst_4 : f32 to vector<8x16xf32>
    %13 = arith.select %4, %8, %12 : vector<8x16xi1>, vector<8x16xf32>
    %cst_5 = arith.constant dense<0.000000e+00> : vector<8xf32>
    %14 = vector.multi_reduction <add>, %13, %cst_5 [1] : vector<8x16xf32> to vector<8xf32>
    %15 = vector.shape_cast %14 : vector<8xf32> to vector<8x1xf32>
    %16 = math.exp %15 : vector<8x1xf32>
    %cst_6 = arith.constant -0.864664733 : f32
    %17 = vector.broadcast %cst_6 : f32 to vector<8x1xf32>
    %18 = arith.mulf %17, %16 : vector<8x1xf32>
    %19 = arith.addf %11, %18 : vector<8x1xf32>
    %20 = math.log %19 : vector<8x1xf32>
    %21 = arith.subf %20, %15 : vector<8x1xf32>
    %cst_7 = arith.constant 2.000000e+00 : f32
    %22 = vector.broadcast %cst_7 : f32 to vector<8x1xf32>
    %23 = arith.addf %21, %22 : vector<8x1xf32>
    %c8_i32 = arith.constant 8 : i32
    %24 = arith.muli %arg0, %c8_i32 : i32
    %25 = tpu.iota {dimensions = array<i32: 0>} : vector<8x1xi32>
    %26 = vector.broadcast %24 : i32 to vector<8x1xi32>
    %27 = arith.addi %26, %25 : vector<8x1xi32>
    %c16_i32 = arith.constant 16 : i32
    %28 = vector.broadcast %c16_i32 : i32 to vector<8x1xi32>
    %29 = arith.cmpi slt, %27, %28 : vector<8x1xi32>
    %cst_8 = arith.constant 0.000000e+00 : f32
    %30 = vector.broadcast %cst_8 : f32 to vector<8x1xf32>
    %31 = arith.select %29, %23, %30 : vector<8x1xi1>, vector<8x1xf32>
    %cst_9 = arith.constant dense<0.000000e+00> : vector<1xf32>
    %32 = vector.multi_reduction <add>, %31, %cst_9 [0] : vector<8x1xf32> to vector<1xf32>
    %33 = vector.shape_cast %32 : vector<1xf32> to vector<1x1xf32>
    %34 = tpu.iota {dimensions = array<i32: 0>} : vector<8x128xi32>
    %35 = tpu.iota {dimensions = array<i32: 1>} : vector<8x128xi32>
    %c0_i32 = arith.constant 0 : i32
    %36 = vector.broadcast %c0_i32 : i32 to vector<8x128xi32>
    %37 = arith.cmpi eq, %34, %36 : vector<8x128xi32>
    %c0_i32_10 = arith.constant 0 : i32
    %38 = vector.broadcast %c0_i32_10 : i32 to vector<8x128xi32>
    %39 = arith.cmpi eq, %35, %38 : vector<8x128xi32>
    %40 = arith.andi %37, %39 : vector<8x128xi1>
    %41 = vector.shape_cast %33 : vector<1x1xf32> to vector<1x1xf32>
    %42 = vector.broadcast %41 : vector<1x1xf32> to vector<8x128xf32>
    %cst_11 = arith.constant 0.000000e+00 : f32
    %43 = vector.broadcast %cst_11 : f32 to vector<8x128xf32>
    %44 = arith.select %40, %42, %43 : vector<8x128xi1>, vector<8x128xf32>
    %c0_12 = arith.constant 0 : index
    %c0_13 = arith.constant 0 : index
    %45 = vector.load %arg3[%c0_12, %c0_13] : memref<8x128xf32, #tpu.memory_space<vmem>>, vector<8x128xf32>
    tpu.vector_store %arg3[%c0_12, %c0_13], %44 {strides = array<i32>} : memref<8x128xf32, #tpu.memory_space<vmem>>, vector<8x128xf32>,
    return
  }
  func.func @transform_0(%arg0: i32) -> (i32, i32) {
    %c0_i32 = arith.constant 0 : i32
    %c0_i32_0 = arith.constant 0 : i32
    return %arg0, %c0_i32 : i32, i32
  }
  func.func @transform_1(%arg0: i32) -> (i32, i32) {
    %c0_i32 = arith.constant 0 : i32
    %c0_i32_0 = arith.constant 0 : i32
    return %arg0, %c0_i32 : i32, i32
  }
  func.func @transform_2(%arg0: i32) -> (i32, i32) {
    %c0_i32 = arith.constant 0 : i32
    %c0_i32_0 = arith.constant 0 : i32
    return %arg0, %c0_i32 : i32, i32
  }
}

</mosaic_0001>

<llo_original>
// kernel: tpu_custom_call.1
$region0: #{tpu_custom_call.1}
  #allocation0 [shape = 'u32[]', space=smem, size = 0x4, offset = 0x4, fixed_abs, tag = 'smem constant byte address 0x4 - core index']
  #allocation1 [shape = 'u32[144,128]{1,0:T(1,128)}', space=vmem, size = 0x12000, scoped, tag = 'internal scratch']
  %s0 = inlined_call_operand.vmem [shape: f32[16,16], index: 0, kind: input, shape index: {}]
  %s1 = inlined_call_operand.vmem [shape: s32[16,1], index: 1, kind: input, shape index: {}]
  %s2 = inlined_call_operand.hbm [shape: f32[16,128], index: 2, kind: output, shape index: {}]
  %s3 = sld [smem:[#allocation0]]
  $region41: #{tpu_custom_call.1} parent=0
    _
  %s5 = ssub.s32 1, %s3
  %s6 = scalar_select 0, %s5, %s3
  $region1: #{tpu_custom_call.1} parent=0
    #allocation2 [shape = 'u8[8192]{0}', space=vmem, size = 0x2000, scoped, tag = 'output window, operand 0']
    #allocation3 [shape = 's32[2]{0}', space=sflag, size = 0x8, scoped, tag = 'scoped memory for tpu_custom_call.1']
    %7 = vsyncpa [#allocation3], 0
    %s8 = scalar_lea.sflag [#allocation3], 1
    %9 = vsyncpa %s8, 0
    loop: start=0, step=1, limit=4
    $region2: #{tpu_custom_call.1} parent=1 // loop_pre_header
      _
    $region3: #{tpu_custom_call.1} parent=1 // loop_header
      %s11 = sphi 0, %s15
      %p12 = scmp.ge.s32.totalorder %s11, 4
      %s21 = sphi 0, %s23
      %s24 = sphi 0, %s21
      %s25 = sphi 0, %s24
      %s41 = sphi 0, %s25
      %s47 = sphi 0, %s49
      %s50 = sphi 0, %s47
      %s51 = sphi 0, %s50
      %s67 = sphi 0, %s51
      %s73 = sphi 0, %s75
      %s76 = sphi 0, %s73
      %s77 = sphi 0, %s76
      %s93 = sphi 0, %s77
    $region4: #{tpu_custom_call.1} parent=1 // loop_header_branch
      %14 = sbr.rel (%p12) target = $region8
    $region5: #{tpu_custom_call.1} parent=1 // loop_body
      %s16 = ssub.s32 %s11, 1
      %s17 = ssub.s32 %s11, 2
      %s18 = sadd.s32 %s11, 1
      %s19 = ssub.s32 %s11, %s18
      %p20 = scmp.eq.s32.totalorder %s19, 0
      %s22 = sadd.s32 %s21, 1
      %s23 = scalar_select %p20, %s21, %s22
      %p26 = pneg %p20
      %p27 = scmp.eq.s32.totalorder %s11, 1
      %p28 = por %p26, %p27
      %p29 = scmp.ne.s32.totalorder %s21, %s24
      %p30 = scmp.eq.s32.totalorder %s11, 0
      %p31 = por %p29, %p30
      %p32 = scmp.ne.s32.totalorder %s21, %s24
      %p33 = scmp.eq.s32.totalorder %s16, 1
      %p34 = por %p32, %p33
      %p35 = scmp.ne.s32.totalorder %s24, %s25
      %p36 = scmp.eq.s32.totalorder %s16, 0
      %p37 = por %p35, %p36
      %p38 = scmp.ne.s32.totalorder %s24, %s25
      %p39 = scmp.eq.s32.totalorder %s17, 1
      %p40 = por %p38, %p39
      %p42 = scmp.ne.s32.totalorder %s25, %s41
      %p43 = scmp.eq.s32.totalorder %s17, 0
      %p44 = por %p42, %p43
      %s45 = ssub.s32 %s11, %s18
      %p46 = scmp.eq.s32.totalorder %s45, 0
      %s48 = sadd.s32 %s47, 1
      %s49 = scalar_select %p46, %s47, %s48
      %p52 = pneg %p46
      %p53 = scmp.eq.s32.totalorder %s11, 1
      %p54 = por %p52, %p53
      %p55 = scmp.ne.s32.totalorder %s47, %s50
      %p56 = scmp.eq.s32.totalorder %s11, 0
      %p57 = por %p55, %p56
      %p58 = scmp.ne.s32.totalorder %s47, %s50
      %p59 = scmp.eq.s32.totalorder %s16, 1
      %p60 = por %p58, %p59
      %p61 = scmp.ne.s32.totalorder %s50, %s51
      %p62 = scmp.eq.s32.totalorder %s16, 0
      %p63 = por %p61, %p62
      %p64 = scmp.ne.s32.totalorder %s50, %s51
      %p65 = scmp.eq.s32.totalorder %s17, 1
      %p66 = por %p64, %p65
      %p68 = scmp.ne.s32.totalorder %s51, %s67
      %p69 = scmp.eq.s32.totalorder %s17, 0
      %p70 = por %p68, %p69
      %s71 = ssub.s32 %s11, %s18
      %p72 = scmp.eq.s32.totalorder %s71, 0
      %s74 = sadd.s32 %s73, 1
      %s75 = scalar_select %p72, %s73, %s74
      %p78 = pneg %p72
      %p79 = scmp.eq.s32.totalorder %s11, 1
      %p80 = por %p78, %p79
      %p81 = scmp.ne.s32.totalorder %s73, %s76
      %p82 = scmp.eq.s32.totalorder %s11, 0
      %p83 = por %p81, %p82
      %p84 = scmp.ne.s32.totalorder %s73, %s76
      %p85 = scmp.eq.s32.totalorder %s16, 1
      %p86 = por %p84, %p85
      %p87 = scmp.ne.s32.totalorder %s76, %s77
      %p88 = scmp.eq.s32.totalorder %s16, 0
      %p89 = por %p87, %p88
      %p90 = scmp.ne.s32.totalorder %s76, %s77
      %p91 = scmp.eq.s32.totalorder %s17, 1
      %p92 = por %p90, %p91
      %p94 = scmp.ne.s32.totalorder %s77, %s93
      %p95 = scmp.eq.s32.totalorder %s17, 0
      %p96 = por %p94, %p95
      %p97 = scmp.le.s32.totalorder 1, %s11
      %p98 = scmp.lt.s32.totalorder %s11, 3
      %p99 = pnand %p97, %p98
      %p100 = pneg %p99
      // Predicated region
      $region9: #{tpu_custom_call.1} parent=5 // pred_check
        _
      $region10: #{tpu_custom_call.1} parent=5 // pred_check_branch
        %102 = sbr.rel (%p99) target = $region12
      $region11: #{tpu_custom_call.1} parent=5 // pred_region
        %s103 = ssub.s32 %s11, 1
      $region12: #{tpu_custom_call.1} parent=5 // pred_fallthru
        _
      %p104 = scmp.lt.s32.totalorder %s11, 2
      // Predicated region
      $region13: #{tpu_custom_call.1} parent=5 // pred_check
        %p105 = pneg %p104
      $region14: #{tpu_custom_call.1} parent=5 // pred_check_branch
        %107 = sbr.rel (%p105) target = $region16
      $region15: #{tpu_custom_call.1} parent=5 // pred_region
        // Predicated region
        $region17: #{tpu_custom_call.1} parent=15 // pred_check
          %p108 = pneg %p31
        $region18: #{tpu_custom_call.1} parent=15 // pred_check_branch
          %110 = sbr.rel (%p108) target = $region20
        $region19: #{tpu_custom_call.1} parent=15 // pred_region
          %p111 = scmp.lt.s32.totalorder %s11, 1
          %s112 = scalar_select %p111, %s11, 1
          %s113 = smul.addr %s112, 8
          %s114 = scalar_lea.vmem %s0, %s113
        $region20: #{tpu_custom_call.1} parent=15 // pred_fallthru
          _
        // Predicated region
        $region21: #{tpu_custom_call.1} parent=15 // pred_check
          %p115 = pneg %p57
        $region22: #{tpu_custom_call.1} parent=15 // pred_check_branch
          %117 = sbr.rel (%p115) target = $region24
        $region23: #{tpu_custom_call.1} parent=15 // pred_region
          %p118 = scmp.lt.s32.totalorder %s11, 1
          %s119 = scalar_select %p118, %s11, 1
          %s120 = smul.addr %s119, 8
          %s121 = scalar_lea.vmem %s1, %s120
        $region24: #{tpu_custom_call.1} parent=15 // pred_fallthru
          _
      $region16: #{tpu_custom_call.1} parent=5 // pred_fallthru
        _
      %p122 = scmp.le.s32.totalorder 1, %s11
      %p123 = scmp.lt.s32.totalorder %s11, 3
      %p124 = pnand %p122, %p123
      %p125 = pneg %p124
      // Predicated region
      $region25: #{tpu_custom_call.1} parent=5 // pred_check
        _
      $region26: #{tpu_custom_call.1} parent=5 // pred_check_branch
        %127 = sbr.rel (%p124) target = $region28
      $region27: #{tpu_custom_call.1} parent=5 // pred_region
        %s128 = ssub.s32 %s11, 1
        %p129 = scmp.lt.s32.totalorder %s16, 1
        %s130 = scalar_select %p129, %s16, 1
        %s131 = smul.addr %s130, 8
        %s132 = scalar_lea.vmem %s0, %s131
        %p133 = pneg %p37
        %p134 = pneg %p34
        %p135 = scmp.lt.s32.totalorder %s16, 1
        %s136 = scalar_select %p135, %s16, 1
        %s137 = smul.addr %s136, 8
        %s138 = scalar_lea.vmem %s1, %s137
        %p139 = pneg %p63
        %p140 = pneg %p60
        %p141 = pneg %p89
        %p142 = pneg %p86
        %s143 = sand.u32 %s76, 1
        %s144 = scalar_lea.sflag [#allocation3], %s143
        %s145 = sand.u32 %s76, 1
        %s146 = smul.addr %s145, 8
        %s147 = scalar_lea.vmem [#allocation2], %s146
        %p148 = scmp.lt.s32.totalorder %s16, 1
        %s149 = scalar_select %p148, %s16, 1
        %s150 = smul.addr %s149, 8
        %s151 = scalar_lea.vmem %s0, %s150
        %p152 = scmp.lt.s32.totalorder %s16, 1
        %s153 = scalar_select %p152, %s16, 1
        %s154 = smul.addr %s153, 8
        %s155 = scalar_lea.vmem %s1, %s154
        %v156 = vld [vmem:[%s151] sm:$0xff]
        %v157 = vld [vmem:[%s155] sm:$0xff]
        %v158 = vlaneseq
        %v159 = vand.u32 %v158, 127
        %160 = vset.pattern.permute.xlu0 0
        %161 = vperm.xlu0 %160, %v157
        %v162 = vpop.permute.xlu0 %161
        %vm163 = vcmp.eq.s32.totalorder %v159, %v162
        %vm164 = vcmask 130048
        %v165 = vsel %vm164, %v156, -inf
        %166 = vmax.xlane.f32.xlu0 %v165
        %v167 = vpop.xlane.xlu0 %166
        %v168 = vsub.f32 %v156, %v167
        %v169 = vmul.f32 %v168, 1.442695
        %v170 = vpow.pop %v169
        %v171 = vsel %vm164, %v170, 0.0
        %172 = vadd.xlane.f32.xlu0 %v171
        %v173 = vpop.xlane.xlu0 %172
        %v174 = vsel %vm163, %v168, 0.0
        %v175 = vsel %vm164, %v174, 0.0
        %176 = vadd.xlane.f32.xlu0 %v175
        %v177 = vpop.xlane.xlu0 %176
        %v178 = vmul.f32 %v177, 1.442695
        %v179 = vpow.pop %v178
        %v180 = vmul.f32 %v179, -0.86466473
        %v181 = vadd.f32 %v173, %v180
        %v182 = vlog2.pop %v181
        %v183 = vmul.f32 %v182, 0.6931472
        %v184 = vsub.f32 %v183, %v177
        %v185 = vadd.f32 %v184, 2.0
        %s186 = smul.u32 %s16, 8
        %v187 = vlaneseq
        %v188 = vshrl.u32 %v187, 7
        %v189 = vstv %s186
        %v190 = vadd.s32 %v189, %v188
        %vm191 = vcmp.lt.s32.totalorder %v190, 16
        %v192 = vsel %vm191, %v185, 0.0
        %v193 = vrot.slane %v192, 4
        %v194 = vadd.f32 %v192, %v193
        %v195 = vrot.slane %v194, 2
        %v196 = vadd.f32 %v194, %v195
        %v197 = vrot.slane %v196, 1
        %v198 = vadd.f32 %v196, %v197
        %vm199 = vcmp.eq.s32.totalorder %v188, 0
        %vm200 = vcmp.eq.s32.totalorder %v159, 0
        %vm201 = vmand %vm199, %vm200
        %v202 = vsel %vm201, %v198, 0.0
        %203 = vst [vmem:[%s147] sm:$0xff] %v202
        %s204 = sand.u32 %s76, 1
        %s205 = scalar_lea.sflag [#allocation3], %s204
        %s206 = sand.u32 %s76, 1
        %s207 = smul.addr %s206, 8
        %s208 = scalar_lea.vmem [#allocation2], %s207
        // Predicated region
        $region29: #{tpu_custom_call.1} parent=27 // pred_check
          %p209 = pneg %p86
        $region30: #{tpu_custom_call.1} parent=27 // pred_check_branch
          %211 = sbr.rel (%p209) target = $region32
        $region31: #{tpu_custom_call.1} parent=27 // pred_region
          %s213 = ssub.s32 128, 128
          %214 = vsyncadd %s205, %s213
          %s215 = smul.addr %s16, 128
          %s216 = scalar_lea.hbm %s2, %s215
          %s218 = sshll.u32 %s208, 4
          %s219 = int_to_ptr.vmem [resolvable:$true] %s218
          %221 = dma.vmem_to_hbm [thread:$0]  %s219, 128, %s216, %s205
        $region32: #{tpu_custom_call.1} parent=27 // pred_fallthru
          _
      $region28: #{tpu_custom_call.1} parent=5 // pred_fallthru
        _
      %p222 = scmp.le.s32.totalorder 2, %s11
      // Predicated region
      $region33: #{tpu_custom_call.1} parent=5 // pred_check
        %p223 = pneg %p222
      $region34: #{tpu_custom_call.1} parent=5 // pred_check_branch
        %225 = sbr.rel (%p223) target = $region36
      $region35: #{tpu_custom_call.1} parent=5 // pred_region
        %s226 = ssub.s32 %s11, 2
        // Predicated region
        $region37: #{tpu_custom_call.1} parent=35 // pred_check
          %p227 = pneg %p92
        $region38: #{tpu_custom_call.1} parent=35 // pred_check_branch
          %229 = sbr.rel (%p227) target = $region40
        $region39: #{tpu_custom_call.1} parent=35 // pred_region
          %s230 = sand.u32 %s77, 1
          %s231 = scalar_lea.sflag [#allocation3], %s230
          %s232 = sand.u32 %s77, 1
          %s233 = smul.addr %s232, 8
          %s234 = scalar_lea.vmem [#allocation2], %s233
          %235 = dma.done %s231, 128
        $region40: #{tpu_custom_call.1} parent=35 // pred_fallthru
          _
      $region36: #{tpu_custom_call.1} parent=5 // pred_fallthru
        _
    $region6: #{tpu_custom_call.1} parent=1 // loop_footer
      %s15 = sadd.s32 1, %s11
    $region7: #{tpu_custom_call.1} parent=1 // loop_footer_branch
      %10 = sbr.rel target = $region3
    $region8: #{tpu_custom_call.1} parent=1 // loop_exit
      _
    %236 = vsyncpa [#allocation3], 1
    %s237 = scalar_lea.sflag [#allocation3], 1
    %238 = vsyncpa %s237, 1

</llo_original>
